<compile_context>
chip_gen: v6e
topology: v6e:2x2x1
jax: 0.10.0
libtpu: 0.0.40
codegen_flags: <defaults>
</compile_context>

<pallas_src>
import jax
import jax.numpy as jnp
from jax.experimental import pallas as pl
from jax.experimental.pallas import tpu as pltpu


# ----------------------------- kernel body ---------------------------------

def _copy_kernel(x_ref, o_ref):
    # Lane/sublane-dense identity block copy.
    o_ref[...] = x_ref[...]


# ----------------------------- tiling helpers ------------------------------

_LANE = 128
_SUBLANE = {1: 32, 2: 16, 4: 8, 8: 8}      # packed sublane multiple per itemsize
_LANE_CAP = 8192                            # max lanes per slab row
_BLOCK_COL_CAP = 4096                       # max lanes per block
_BLOCK_BYTES_TARGET = 2 * 1024 * 1024       # ~2 MiB blocks: amortize per-step
                                            # overhead; 4x (dbl-buffered in+out)
                                            # = 8 MiB < every gen's scoped VMEM.


def _pick_block_rows(rows, cols, itemsize, sub):
    target_rows = max(1, _BLOCK_BYTES_TARGET // (cols * itemsize))
    if rows <= max(target_rows, sub):
        return rows                          # full extent: always legal
    return max(sub, (min(target_rows, rows) // sub) * sub)


def _choose_layout(total, itemsize, sub):
    """Factor `total` elements into a lane-dense (rows, cols) slab + block."""
    # Largest multiple of 128 <= _LANE_CAP that divides total.
    cols = _LANE
    for cand in range(min(_LANE_CAP, total), _LANE - 1, -_LANE):
        if total % cand == 0:
            cols = cand
            break
    rows = total // cols
    bc = min(cols, _BLOCK_COL_CAP)
    br = _pick_block_rows(rows, bc, itemsize, sub)
    return rows, cols, br, bc


# ----------------------------- materialized copy ---------------------------

def _materialized_copy_2d(x2):
    """Identity copy of a 2D (n, flat) array via a tiled Pallas kernel."""
    n, flat = x2.shape
    total = n * flat
    itemsize = jnp.dtype(x2.dtype).itemsize
    sub = _SUBLANE.get(itemsize, 8)

    if total % _LANE == 0:
        # Re-flatten (metadata-only) into a lane-dense slab.
        rows, cols, br, bc = _choose_layout(total, itemsize, sub)
        slab = jnp.reshape(x2, (rows, cols))
    else:
        # Lane-unfriendly total: keep (n, flat), full-extent last dim
        # (correct, just uses masked stores on the narrow lane edge).
        rows, cols = n, flat
        bc = cols
        br = _pick_block_rows(rows, cols, itemsize, sub)
        slab = x2

    grid = (pl.cdiv(rows, br), pl.cdiv(cols, bc))

    out = pl.pallas_call(
        _copy_kernel,
        out_shape=jax.ShapeDtypeStruct((rows, cols), x2.dtype),
        grid_spec=pltpu.PrefetchScalarGridSpec(
            num_scalar_prefetch=0,
            grid=grid,
            in_specs=[pl.BlockSpec((br, bc), lambda i, j: (i, j))],
            out_specs=pl.BlockSpec((br, bc), lambda i, j: (i, j)),
        ),
        compiler_params=pltpu.CompilerParams(
            dimension_semantics=("parallel", "parallel"),
        ),
        cost_estimate=pl.CostEstimate(
            flops=0, transcendentals=0, bytes_accessed=2 * total * itemsize,
        ),
    )(slab)

    return jnp.reshape(out, (n, flat))


# ----------------------------- public wrapper ------------------------------

def unflatten_batch(x, shape, materialize=False):
    """JAX equivalent of UnflattenBatch(shape)(x) == x.view(-1, *shape).

    materialize=False (default): metadata-only reshape (matches torch.view on
    contiguous memory; zero HBM traffic).
    materialize=True: force a fresh buffer through the Pallas copy kernel.
    """
    s0, s1, s2 = shape
    flat = s0 * s1 * s2
    total = x.size
    assert total % flat == 0, "input numel must be divisible by prod(shape)"
    n = total // flat

    if not materialize:
        return jnp.reshape(x, (n, s0, s1, s2))

    x2 = jnp.reshape(x, (n, flat))
    out2 = _materialized_copy_2d(x2)
    return jnp.reshape(out2, (n, s0, s1, s2))


if __name__ == "__main__":
    # Consistent with an NCHW conv pipeline: batch=2, channels=4, spatial=16x16,
    # input arrives flattened as (2, 4*16*16).
    shape = [4, 16, 16]
    key = jax.random.PRNGKey(0)
    x = jax.random.normal(key, (2, shape[0] * shape[1] * shape[2]), jnp.float32)

    ref = jnp.reshape(x, (-1, shape[0], shape[1], shape[2]))

    # Fast (metadata-only) path — preferred in real pipelines.
    out_view = unflatten_batch(x, shape)

    # Materialized path — exercises the Pallas kernel.
    out_copy = unflatten_batch(x, shape, materialize=True)
    out_copy = jax.block_until_ready(out_copy)

    assert out_copy.shape == (2, 4, 16, 16), out_copy.shape
    assert out_copy.dtype == x.dtype
    assert bool(jnp.array_equal(out_view, ref)), "view path mismatch"
    assert bool(jnp.array_equal(out_copy, ref)), "kernel path mismatch"

    print("KERNEL_OK")
</pallas_src>

<mosaic_0001>
module attributes {stable_mosaic.version = 11 : i64} {
  func.func @_copy_kernel(%arg0: i32, %arg1: i32, %arg2: memref<1x2048xf32, #tpu.memory_space<vmem>>, %arg3: memref<1x2048xf32, #tpu.memory_space<vmem>>) attributes {dimension_semantics = [#tpu.dimension_semantics<parallel>, #tpu.dimension_semantics<parallel>], iteration_bounds = array<i64: 1, 1>, scalar_prefetch = 0 : i64, scratch_operands = 0 : i64, tpu.core_type = #tpu.core_type<tc>, window_params = [{transform_indices = @transform_0, window_bounds = array<i64: 1, 2048>}, {transform_indices = @transform_1, window_bounds = array<i64: 1, 2048>}]} {
    %c0 = arith.constant 0 : index
    %c0_0 = arith.constant 0 : index
    %0 = vector.load %arg2[%c0, %c0_0] : memref<1x2048xf32, #tpu.memory_space<vmem>>, vector<1x2048xf32>
    %c0_1 = arith.constant 0 : index
    %c0_2 = arith.constant 0 : index
    %1 = vector.load %arg3[%c0_1, %c0_2] : memref<1x2048xf32, #tpu.memory_space<vmem>>, vector<1x2048xf32>
    tpu.vector_store %arg3[%c0_1, %c0_2], %0 {strides = array<i32>} : memref<1x2048xf32, #tpu.memory_space<vmem>>, vector<1x2048xf32>,
    return
  }
  func.func @transform_0(%arg0: i32, %arg1: i32) -> (i32, i32) {
    %c0_i32 = arith.constant 0 : i32
    return %arg0, %arg1 : i32, i32
  }
  func.func @transform_1(%arg0: i32, %arg1: i32) -> (i32, i32) {
    %c0_i32 = arith.constant 0 : i32
    return %arg0, %arg1 : i32, i32
  }
}

</mosaic_0001>

<llo_original>
// kernel: tpu_custom_call.1
$region0: #{tpu_custom_call.1}
  #allocation0 [shape = 'u32[]', space=smem, size = 0x4, offset = 0x4, fixed_abs, tag = 'smem constant byte address 0x4 - core index']
  #allocation1 [shape = 'u32[144,128]{1,0:T(1,128)}', space=vmem, size = 0x12000, scoped, tag = 'internal scratch']
  %s0 = inlined_call_operand.hbm [shape: f32[1,2048], index: 0, kind: input, shape index: {}]
  %s1 = inlined_call_operand.hbm [shape: f32[1,2048], index: 1, kind: output, shape index: {}]
  %s2 = sld [smem:[#allocation0]]
  $region18: #{tpu_custom_call.1} parent=0
    _
  %s4 = ssub.s32 1, %s2
  %s5 = scalar_select 0, %s4, %s2
  $region1: #{tpu_custom_call.1} parent=0
    #allocation2 [shape = 'u8[8192]{0}', space=vmem, size = 0x2000, scoped, tag = 'input window, operand 0, single buffered']
    #allocation3 [shape = 's32[1]{0}', space=sflag, size = 0x4, scoped, tag = 'scoped memory for tpu_custom_call.1']
    #allocation4 [shape = 's32[1]{0}', space=sflag, size = 0x4, scoped, tag = 'scoped memory for tpu_custom_call.1']
    #allocation5 [shape = 'u8[8192]{0}', space=vmem, size = 0x2000, scoped, tag = 'output window, operand 0, single buffered']
    %6 = vsyncpa [#allocation3], 0
    %7 = vsyncpa [#allocation4], 0
    // Predicated region
    $region2: #{tpu_custom_call.1} parent=1 // pred_check
      _
    $region3: #{tpu_custom_call.1} parent=1 // pred_check_branch
      %9 = sbr.rel (0) target = $region5
    $region4: #{tpu_custom_call.1} parent=1 // pred_region
      %s11 = ssub.s32 256, 256
      %12 = vsyncadd [#allocation3], %s11
      %s14 = sshll.u32 [#allocation2], 4
      %s15 = int_to_ptr.vmem [resolvable:$true] %s14
      %17 = dma.hbm_to_vmem [thread:$0]  %s0, 256, %s15, [#allocation3]
    $region5: #{tpu_custom_call.1} parent=1 // pred_fallthru
      _
    // Predicated region
    $region6: #{tpu_custom_call.1} parent=1 // pred_check
      _
    $region7: #{tpu_custom_call.1} parent=1 // pred_check_branch
      %19 = sbr.rel (0) target = $region9
    $region8: #{tpu_custom_call.1} parent=1 // pred_region
      %20 = dma.done [#allocation3], 256
    $region9: #{tpu_custom_call.1} parent=1 // pred_fallthru
      _
    %v21 = vld [vmem:[#allocation2] sm:$0xff]
    %v22 = vld [vmem:[#allocation2 + $0x8] sm:$0xff]
    %23 = vst [vmem:[#allocation5] sm:$0xff] %v21
    %24 = vst [vmem:[#allocation5 + $0x8] sm:$0xff] %v22
    // Predicated region
    $region10: #{tpu_custom_call.1} parent=1 // pred_check
      _
    $region11: #{tpu_custom_call.1} parent=1 // pred_check_branch
      %26 = sbr.rel (0) target = $region13
    $region12: #{tpu_custom_call.1} parent=1 // pred_region
      %s28 = ssub.s32 256, 256
      %29 = vsyncadd [#allocation4], %s28
      %s31 = sshll.u32 [#allocation5], 4
      %s32 = int_to_ptr.vmem [resolvable:$true] %s31
      %34 = dma.vmem_to_hbm [thread:$0]  %s32, 256, %s1, [#allocation4]
    $region13: #{tpu_custom_call.1} parent=1 // pred_fallthru
      _
    // Predicated region
    $region14: #{tpu_custom_call.1} parent=1 // pred_check
      _
    $region15: #{tpu_custom_call.1} parent=1 // pred_check_branch
      %36 = sbr.rel (0) target = $region17
    $region16: #{tpu_custom_call.1} parent=1 // pred_region
      %37 = dma.done [#allocation4], 256
    $region17: #{tpu_custom_call.1} parent=1 // pred_fallthru
      _
    %38 = vsyncpa [#allocation3], 1
    %39 = vsyncpa [#allocation4], 1

</llo_original>
